<compile_context>
chip_gen: v7x
topology: tpu7x:2x2x1
jax: 0.10.0
libtpu: 0.0.40
codegen_flags: <defaults>
</compile_context>

<pallas_src>
import jax
import jax.numpy as jnp
from jax.experimental import pallas as pl
from jax.experimental.pallas import tpu as pltpu

NEG_SLOPE = 0.01  # torch.nn.LeakyReLU default


def _round_up(x, m):
    return ((x + m - 1) // m) * m


def _leaky_relu(y):
    return jnp.where(y >= 0, y, NEG_SLOPE * y)


# ----------------------------------------------------------------------------
# Encoder: fused block-diagonal Linear + bias + LeakyReLU
# ----------------------------------------------------------------------------
def encoder_kernel(x_ref, w_ref, b_ref, o_ref):
    # bf16 operands, f32 MXU accumulation; epilogue in f32.
    y = jnp.dot(x_ref[...], w_ref[...], preferred_element_type=jnp.float32)
    y = y + b_ref[...]                      # (1, E) broadcasts over the tile
    o_ref[...] = _leaky_relu(y).astype(o_ref.dtype)


def encoder_forward(des, tweet, num_prop, cat_prop, params, *,
                    block_b=512, matmul_dtype=jnp.bfloat16):
    ws = [w for (w, _) in params]
    bs = [b for (_, b) in params]
    e4 = ws[0].shape[1]
    emb = 4 * e4
    k_total = sum(w.shape[0] for w in ws)

    # Fused input and block-diagonal weight (one matmul instead of four).
    x_cat = jnp.concatenate([des, tweet, num_prop, cat_prop], axis=1)
    w_bd = jnp.zeros((k_total, emb), jnp.float32)
    row = 0
    for i, w in enumerate(ws):
        w_bd = w_bd.at[row:row + w.shape[0], i * e4:(i + 1) * e4].set(w)
        row += w.shape[0]
    bias = jnp.concatenate(bs, axis=1)          # (1, emb), stays f32

    x_cat = x_cat.astype(matmul_dtype)
    w_bd = w_bd.astype(matmul_dtype)

    batch = x_cat.shape[0]
    tb = min(block_b, _round_up(batch, 8))      # multiple of 8 sublanes
    padded = _round_up(batch, tb)
    if padded != batch:
        x_cat = jnp.pad(x_cat, ((0, padded - batch), (0, 0)))

    out = pl.pallas_call(
        encoder_kernel,
        out_shape=jax.ShapeDtypeStruct((padded, emb), jnp.float32),
        grid=(padded // tb,),
        in_specs=[
            pl.BlockSpec((tb, k_total), lambda i: (i, 0)),
            pl.BlockSpec((k_total, emb), lambda i: (0, 0)),   # resident weight
            pl.BlockSpec((1, emb), lambda i: (0, 0)),         # resident bias
        ],
        out_specs=pl.BlockSpec((tb, emb), lambda i: (i, 0)),
        compiler_params=pltpu.CompilerParams(
            dimension_semantics=("parallel",)),
    )(x_cat, w_bd, bias)
    return out[:batch]


# ----------------------------------------------------------------------------
# RGCNConv (dense formulation): out = x @ W_root + sum_r (A_r @ x) @ W_r
# Row-tiled over nodes; x and weights resident; output padded to 128 lanes.
# ----------------------------------------------------------------------------
def rgcn_kernel(x_ref, adj_ref, wroot_ref, wrel_ref, o_ref):
    tb = o_ref.shape[0]
    row0 = pl.multiple_of(pl.program_id(0) * tb, 8)
    x_all = x_ref[...]                                   # (n_pad, E) bf16, resident
    x_rows = x_ref[pl.ds(row0, tb), :]                   # (tb, E) rows of this tile
    out = jnp.dot(x_rows, wroot_ref[...],
                  preferred_element_type=jnp.float32)    # (tb, out_pad) f32
    for r in range(adj_ref.shape[0]):                    # static (num_relations == 2)
        h = jnp.dot(adj_ref[r], x_all,
                    preferred_element_type=jnp.float32)  # (tb, E) f32
        out = out + jnp.dot(h.astype(wrel_ref.dtype), wrel_ref[r],
                            preferred_element_type=jnp.float32)
    o_ref[...] = out.astype(o_ref.dtype)


def rgcn_forward(x, edge_index, edge_type, w_root, w_rel, *,
                 block_n=256, matmul_dtype=jnp.bfloat16):
    num_nodes, emb = x.shape
    num_rel, _, out_channels = w_rel.shape
    src, dst = edge_index[0], edge_index[1]

    tb = min(block_n, _round_up(num_nodes, 8))
    n_pad = _round_up(num_nodes, tb)
    out_pad = _round_up(max(out_channels, 1), 128)  # lane-dense output stores

    # Per-relation row-normalised dense adjacency (mean aggregation, as in
    # torch_geometric RGCNConv default); built with a jnp scatter-add.
    adjs = []
    for r in range(num_rel):
        m = (edge_type == r).astype(jnp.float32)
        a = jnp.zeros((n_pad, n_pad), jnp.float32).at[dst, src].add(m)
        deg = a.sum(axis=1, keepdims=True)
        adjs.append(a / jnp.maximum(deg, 1.0))
    adj = jnp.stack(adjs, axis=0).astype(matmul_dtype)

    x_p = x
    if n_pad != num_nodes:
        x_p = jnp.pad(x_p, ((0, n_pad - num_nodes), (0, 0)))
    x_p = x_p.astype(matmul_dtype)

    # Zero-pad weights to 128 output lanes -> unmasked full-lane stores.
    w_root_p = jnp.zeros((emb, out_pad), jnp.float32
                         ).at[:, :out_channels].set(w_root).astype(matmul_dtype)
    w_rel_p = jnp.zeros((num_rel, emb, out_pad), jnp.float32
                        ).at[:, :, :out_channels].set(w_rel).astype(matmul_dtype)

    out = pl.pallas_call(
        rgcn_kernel,
        out_shape=jax.ShapeDtypeStruct((n_pad, out_pad), jnp.float32),
        grid=(n_pad // tb,),
        in_specs=[
            pl.BlockSpec((n_pad, emb), lambda i: (0, 0)),            # resident x
            pl.BlockSpec((num_rel, tb, n_pad), lambda i: (0, i, 0)),  # adj row-block
            pl.BlockSpec((emb, out_pad), lambda i: (0, 0)),           # resident W_root
            pl.BlockSpec((num_rel, emb, out_pad), lambda i: (0, 0, 0)),
        ],
        out_specs=pl.BlockSpec((tb, out_pad), lambda i: (i, 0)),
        compiler_params=pltpu.CompilerParams(
            dimension_semantics=("parallel",)),
    )(x_p, adj, w_root_p, w_rel_p)
    return out[:num_nodes, :out_channels]


# ----------------------------------------------------------------------------
# Full module forward
# ----------------------------------------------------------------------------
def ori_rgcn_forward(des, tweet, num_prop, cat_prop, edge_index, edge_type,
                     enc_params, rgcn_params, *,
                     block_b=512, block_n=256, matmul_dtype=jnp.bfloat16):
    x = encoder_forward(des, tweet, num_prop, cat_prop, enc_params,
                        block_b=block_b, matmul_dtype=matmul_dtype)
    w_root, w_rel = rgcn_params
    return rgcn_forward(x, edge_index, edge_type, w_root, w_rel,
                        block_n=block_n, matmul_dtype=matmul_dtype)


# ----------------------------------------------------------------------------
# Parameter init + pure-JAX reference
# ----------------------------------------------------------------------------
def init_encoder_params(key, des_size, tweet_size, num_prop_size,
                        cat_prop_size, embedding_dimension):
    out_dim = embedding_dimension // 4
    keys = jax.random.split(key, 8)
    params = []
    for i, in_dim in enumerate([des_size, tweet_size,
                                num_prop_size, cat_prop_size]):
        w = jax.random.normal(keys[2 * i], (in_dim, out_dim),
                              dtype=jnp.float32) * 0.05
        b = jax.random.normal(keys[2 * i + 1], (1, out_dim),
                              dtype=jnp.float32) * 0.05
        params.append((w, b))
    return params


def init_rgcn_params(key, embedding_dimension, out_channels=2, num_relations=2):
    k1, k2 = jax.random.split(key)
    w_root = jax.random.normal(k1, (embedding_dimension, out_channels),
                               dtype=jnp.float32) * 0.05
    w_rel = jax.random.normal(k2, (num_relations, embedding_dimension,
                                   out_channels), dtype=jnp.float32) * 0.05
    return w_root, w_rel


def reference_forward(des, tweet, num_prop, cat_prop, edge_index, edge_type,
                      enc_params, rgcn_params, matmul_dtype=jnp.bfloat16):
    def c(v):  # mirror the kernel's bf16-operand / f32-accumulate precision
        return v.astype(matmul_dtype).astype(jnp.float32)

    outs = []
    for xin, (w, b) in zip((des, tweet, num_prop, cat_prop), enc_params):
        y = c(xin) @ c(w) + b
        outs.append(jnp.where(y >= 0, y, NEG_SLOPE * y))
    x = jnp.concatenate(outs, axis=1)

    w_root, w_rel = rgcn_params
    num_nodes = x.shape[0]
    src, dst = edge_index[0], edge_index[1]
    out = c(x) @ c(w_root)
    for r in range(w_rel.shape[0]):
        m = (edge_type == r).astype(jnp.float32)
        a = jnp.zeros((num_nodes, num_nodes), jnp.float32).at[dst, src].add(m)
        deg = a.sum(axis=1, keepdims=True)
        a = a / jnp.maximum(deg, 1.0)
        h = c(a) @ c(x)
        out = out + c(h) @ c(w_rel[r])
    return out


if __name__ == "__main__":
    # Small, module-consistent shapes (embedding_dimension=128 is the module
    # default and gives a lane-dense 128-wide encoder output).  Small block
    # sizes are used so the multi-block grid paths are exercised.
    batch = 16
    des_size, tweet_size = 64, 64
    num_prop_size, cat_prop_size = 6, 1
    embedding_dimension = 128
    num_relations, out_channels = 2, 2
    num_edges = 48

    key = jax.random.PRNGKey(0)
    (k_des, k_tw, k_np, k_cp, k_enc, k_rgcn,
     k_src, k_dst, k_et) = jax.random.split(key, 9)

    des = jax.random.normal(k_des, (batch, des_size), dtype=jnp.float32)
    tweet = jax.random.normal(k_tw, (batch, tweet_size), dtype=jnp.float32)
    num_prop = jax.random.normal(k_np, (batch, num_prop_size), dtype=jnp.float32)
    cat_prop = jax.random.normal(k_cp, (batch, cat_prop_size), dtype=jnp.float32)
    edge_index = jnp.stack([
        jax.random.randint(k_src, (num_edges,), 0, batch),
        jax.random.randint(k_dst, (num_edges,), 0, batch)], axis=0)
    edge_type = jax.random.randint(k_et, (num_edges,), 0, num_relations)

    enc_params = init_encoder_params(k_enc, des_size, tweet_size,
                                     num_prop_size, cat_prop_size,
                                     embedding_dimension)
    rgcn_params = init_rgcn_params(k_rgcn, embedding_dimension,
                                   out_channels, num_relations)

    out = ori_rgcn_forward(des, tweet, num_prop, cat_prop, edge_index,
                           edge_type, enc_params, rgcn_params,
                           block_b=8, block_n=8)
    out = jax.block_until_ready(out)

    ref = reference_forward(des, tweet, num_prop, cat_prop, edge_index,
                            edge_type, enc_params, rgcn_params)
    assert out.shape == (batch, out_channels)
    # Kernel uses bf16 matmul operands with f32 accumulation; the reference
    # applies the same bf16 casts, so only accumulation-order differences remain.
    assert jnp.allclose(out, ref, atol=2e-2, rtol=2e-2), "mismatch vs reference"

    print("KERNEL_OK")
</pallas_src>

<mosaic_0001>
module attributes {stable_mosaic.version = 11 : i64} {
  func.func @encoder_kernel(%arg0: i32, %arg1: memref<8x135xbf16, #tpu.memory_space<vmem>>, %arg2: memref<135x128xbf16, #tpu.memory_space<vmem>>, %arg3: memref<1x128xf32, #tpu.memory_space<vmem>>, %arg4: memref<8x128xf32, #tpu.memory_space<vmem>>) attributes {dimension_semantics = [#tpu.dimension_semantics<parallel>], iteration_bounds = array<i64: 2>, scalar_prefetch = 0 : i64, scratch_operands = 0 : i64, tpu.core_type = #tpu.core_type<tc>, window_params = [{transform_indices = @transform_0, window_bounds = array<i64: 8, 135>}, {pipeline_mode = #tpu.pipeline_mode<synchronous>, transform_indices = @transform_1, window_bounds = array<i64: 135, 128>}, {pipeline_mode = #tpu.pipeline_mode<synchronous>, transform_indices = @transform_2, window_bounds = array<i64: 1, 128>}, {transform_indices = @transform_3, window_bounds = array<i64: 8, 128>}]} {
    %c0 = arith.constant 0 : index
    %c0_0 = arith.constant 0 : index
    %0 = vector.load %arg1[%c0, %c0_0] : memref<8x135xbf16, #tpu.memory_space<vmem>>, vector<8x135xbf16>
    %c0_1 = arith.constant 0 : index
    %c0_2 = arith.constant 0 : index
    %1 = vector.load %arg2[%c0_1, %c0_2] : memref<135x128xbf16, #tpu.memory_space<vmem>>, vector<135x128xbf16>
    %cst = arith.constant dense<0.000000e+00> : vector<8x128xf32>
    %2 = tpu.matmul %0, %1, %cst {dimension_numbers = #tpu.dot_dimension_numbers<[1], [0], [0], [1], [0, 0, 1, 1], [], []>} : vector<8x135xbf16>, vector<135x128xbf16>, vector<8x128xf32> -> vector<8x128xf32>
    %c0_3 = arith.constant 0 : index
    %c0_4 = arith.constant 0 : index
    %3 = vector.load %arg3[%c0_3, %c0_4] : memref<1x128xf32, #tpu.memory_space<vmem>>, vector<1x128xf32>
    %4 = vector.broadcast %3 : vector<1x128xf32> to vector<8x128xf32>
    %5 = arith.addf %2, %4 : vector<8x128xf32>
    %cst_5 = arith.constant 0.000000e+00 : f32
    %6 = vector.broadcast %cst_5 : f32 to vector<8x128xf32>
    %7 = arith.cmpf oge, %5, %6 : vector<8x128xf32>
    %cst_6 = arith.constant 0.00999999977 : f32
    %8 = vector.broadcast %cst_6 : f32 to vector<8x128xf32>
    %9 = arith.mulf %8, %5 : vector<8x128xf32>
    %10 = arith.select %7, %5, %9 : vector<8x128xi1>, vector<8x128xf32>
    %c0_7 = arith.constant 0 : index
    %c0_8 = arith.constant 0 : index
    %11 = vector.load %arg4[%c0_7, %c0_8] : memref<8x128xf32, #tpu.memory_space<vmem>>, vector<8x128xf32>
    tpu.vector_store %arg4[%c0_7, %c0_8], %10 {strides = array<i32>} : memref<8x128xf32, #tpu.memory_space<vmem>>, vector<8x128xf32>,
    return
  }
  func.func @transform_0(%arg0: i32) -> (i32, i32) {
    %c0_i32 = arith.constant 0 : i32
    %c0_i32_0 = arith.constant 0 : i32
    return %arg0, %c0_i32 : i32, i32
  }
  func.func @transform_1(%arg0: i32) -> (i32, i32) {
    %c0_i32 = arith.constant 0 : i32
    %c0_i32_0 = arith.constant 0 : i32
    %c0_i32_1 = arith.constant 0 : i32
    return %c0_i32, %c0_i32_0 : i32, i32
  }
  func.func @transform_2(%arg0: i32) -> (i32, i32) {
    %c0_i32 = arith.constant 0 : i32
    %c0_i32_0 = arith.constant 0 : i32
    %c0_i32_1 = arith.constant 0 : i32
    return %c0_i32, %c0_i32_0 : i32, i32
  }
  func.func @transform_3(%arg0: i32) -> (i32, i32) {
    %c0_i32 = arith.constant 0 : i32
    %c0_i32_0 = arith.constant 0 : i32
    return %arg0, %c0_i32 : i32, i32
  }
}

</mosaic_0001>

<llo_original>
// kernel: tpu_custom_call.1
$region0: #{tpu_custom_call.1}
  #allocation0 [shape = 'u32[]', space=smem, size = 0x4, offset = 0x4, fixed_abs, tag = 'smem constant byte address 0x4 - core index']
  #allocation1 [shape = 'u32[144,128]{1,0:T(1,128)}', space=vmem, size = 0x12000, scoped, tag = 'internal scratch']
  %s0 = inlined_call_operand.hbm [shape: bf16[16,135], index: 0, kind: input, shape index: {}]
  %s1 = inlined_call_operand.hbm [shape: bf16[135,128], index: 1, kind: input, shape index: {}]
  %s2 = inlined_call_operand.vmem [shape: f32[1,128], index: 2, kind: input, shape index: {}]
  %s3 = inlined_call_operand.hbm [shape: f32[16,128], index: 3, kind: output, shape index: {}]
  %s4 = sld [smem:[#allocation0]]
  $region53: #{tpu_custom_call.1} parent=0
    _
  %s6 = ssub.s32 1, %s4
  %s7 = scalar_select 0, %s6, %s4
  $region1: #{tpu_custom_call.1} parent=0
    #allocation2 [shape = 'u8[8192]{0}', space=vmem, size = 0x2000, scoped, tag = 'input window, operand 0']
    #allocation3 [shape = 's32[2]{0}', space=sflag, size = 0x8, scoped, tag = 'scoped memory for tpu_custom_call.1']
    #allocation4 [shape = 's32[2]{0}', space=sflag, size = 0x8, scoped, tag = 'scoped memory for tpu_custom_call.1']
    #allocation5 [shape = 'u8[34816]{0}', space=vmem, size = 0x8800, scoped, tag = 'input window, operand 1, single buffered']
    #allocation6 [shape = 's32[1]{0}', space=sflag, size = 0x4, scoped, tag = 'scoped memory for tpu_custom_call.1']
    #allocation7 [shape = 'u8[8192]{0}', space=vmem, size = 0x2000, scoped, tag = 'output window, operand 0']
    %8 = vsyncpa [#allocation3], 0
    %s9 = scalar_lea.sflag [#allocation3], 1
    %10 = vsyncpa %s9, 0
    %11 = vsyncpa [#allocation6], 0
    %12 = vsyncpa [#allocation4], 0
    %s13 = scalar_lea.sflag [#allocation4], 1
    %14 = vsyncpa %s13, 0
    loop: start=0, step=1, limit=4
    $region2: #{tpu_custom_call.1} parent=1 // loop_pre_header
      _
    $region3: #{tpu_custom_call.1} parent=1 // loop_header
      %s16 = sphi 0, %s20
      %p17 = scmp.ge.s32.totalorder %s16, 4
      %s26 = sphi 0, %s28
      %s29 = sphi 0, %s26
      %s30 = sphi 0, %s29
      %s46 = sphi 0, %s30
      %s50 = sphi 0, %s50
      %s52 = sphi 0, %s50
      %s53 = sphi 0, %s52
      %s67 = sphi 0, %s53
      %s71 = sphi 0, %s71
      %s73 = sphi 0, %s71
      %s74 = sphi 0, %s73
      %s88 = sphi 0, %s74
      %s94 = sphi 0, %s96
      %s97 = sphi 0, %s94
      %s98 = sphi 0, %s97
      %s114 = sphi 0, %s98
    $region4: #{tpu_custom_call.1} parent=1 // loop_header_branch
      %19 = sbr.rel (%p17) target = $region8
    $region5: #{tpu_custom_call.1} parent=1 // loop_body
      %s21 = ssub.s32 %s16, 1
      %s22 = ssub.s32 %s16, 2
      %s23 = sadd.s32 %s16, 1
      %s24 = ssub.s32 %s16, %s23
      %p25 = scmp.eq.s32.totalorder %s24, 0
      %s27 = sadd.s32 %s26, 1
      %s28 = scalar_select %p25, %s26, %s27
      %p31 = pneg %p25
      %p32 = scmp.eq.s32.totalorder %s16, 1
      %p33 = por %p31, %p32
      %p34 = scmp.ne.s32.totalorder %s26, %s29
      %p35 = scmp.eq.s32.totalorder %s16, 0
      %p36 = por %p34, %p35
      %p37 = scmp.ne.s32.totalorder %s26, %s29
      %p38 = scmp.eq.s32.totalorder %s21, 1
      %p39 = por %p37, %p38
      %p40 = scmp.ne.s32.totalorder %s29, %s30
      %p41 = scmp.eq.s32.totalorder %s21, 0
      %p42 = por %p40, %p41
      %p43 = scmp.ne.s32.totalorder %s29, %s30
      %p44 = scmp.eq.s32.totalorder %s22, 1
      %p45 = por %p43, %p44
      %p47 = scmp.ne.s32.totalorder %s30, %s46
      %p48 = scmp.eq.s32.totalorder %s22, 0
      %p49 = por %p47, %p48
      %s51 = sadd.s32 %s50, 1
      %p54 = scmp.eq.s32.totalorder %s16, 1
      %p55 = scmp.ne.s32.totalorder %s50, %s52
      %p56 = scmp.eq.s32.totalorder %s16, 0
      %p57 = por %p55, %p56
      %p58 = scmp.ne.s32.totalorder %s50, %s52
      %p59 = scmp.eq.s32.totalorder %s21, 1
      %p60 = por %p58, %p59
      %p61 = scmp.ne.s32.totalorder %s52, %s53
      %p62 = scmp.eq.s32.totalorder %s21, 0
      %p63 = por %p61, %p62
      %p64 = scmp.ne.s32.totalorder %s52, %s53
      %p65 = scmp.eq.s32.totalorder %s22, 1
      %p66 = por %p64, %p65
      %p68 = scmp.ne.s32.totalorder %s53, %s67
      %p69 = scmp.eq.s32.totalorder %s22, 0
      %p70 = por %p68, %p69
      %s72 = sadd.s32 %s71, 1
      %p75 = scmp.eq.s32.totalorder %s16, 1
      %p76 = scmp.ne.s32.totalorder %s71, %s73
      %p77 = scmp.eq.s32.totalorder %s16, 0
      %p78 = por %p76, %p77
      %p79 = scmp.ne.s32.totalorder %s71, %s73
      %p80 = scmp.eq.s32.totalorder %s21, 1
      %p81 = por %p79, %p80
      %p82 = scmp.ne.s32.totalorder %s73, %s74
      %p83 = scmp.eq.s32.totalorder %s21, 0
      %p84 = por %p82, %p83
      %p85 = scmp.ne.s32.totalorder %s73, %s74
      %p86 = scmp.eq.s32.totalorder %s22, 1
      %p87 = por %p85, %p86
      %p89 = scmp.ne.s32.totalorder %s74, %s88
      %p90 = scmp.eq.s32.totalorder %s22, 0
      %p91 = por %p89, %p90
      %s92 = ssub.s32 %s16, %s23
      %p93 = scmp.eq.s32.totalorder %s92, 0
      %s95 = sadd.s32 %s94, 1
      %s96 = scalar_select %p93, %s94, %s95
      %p99 = pneg %p93
      %p100 = scmp.eq.s32.totalorder %s16, 1
      %p101 = por %p99, %p100
      %p102 = scmp.ne.s32.totalorder %s94, %s97
      %p103 = scmp.eq.s32.totalorder %s16, 0
      %p104 = por %p102, %p103
      %p105 = scmp.ne.s32.totalorder %s94, %s97
      %p106 = scmp.eq.s32.totalorder %s21, 1
      %p107 = por %p105, %p106
      %p108 = scmp.ne.s32.totalorder %s97, %s98
      %p109 = scmp.eq.s32.totalorder %s21, 0
      %p110 = por %p108, %p109
      %p111 = scmp.ne.s32.totalorder %s97, %s98
      %p112 = scmp.eq.s32.totalorder %s22, 1
      %p113 = por %p111, %p112
      %p115 = scmp.ne.s32.totalorder %s98, %s114
      %p116 = scmp.eq.s32.totalorder %s22, 0
      %p117 = por %p115, %p116
      %p118 = scmp.le.s32.totalorder 1, %s16
      %p119 = scmp.lt.s32.totalorder %s16, 3
      %p120 = pnand %p118, %p119
      %p121 = pneg %p120
      // Predicated region
      $region9: #{tpu_custom_call.1} parent=5 // pred_check
        _
      $region10: #{tpu_custom_call.1} parent=5 // pred_check_branch
        %123 = sbr.rel (%p120) target = $region12
      $region11: #{tpu_custom_call.1} parent=5 // pred_region
        %s124 = ssub.s32 %s16, 1
        // Predicated region
        $region13: #{tpu_custom_call.1} parent=11 // pred_check
          %p125 = pneg %p63
        $region14: #{tpu_custom_call.1} parent=11 // pred_check_branch
          %127 = sbr.rel (%p125) target = $region16
        $region15: #{tpu_custom_call.1} parent=11 // pred_region
          %s129 = ssub.s32 1088, 1088
          %130 = vsyncadd [#allocation6], %s129
          %s131 = sshll.u32 [#allocation5], 4
          %s132 = int_to_ptr.vmem [resolvable:$true] %s131
          %137 = dma.hbm_to_vmem [thread:$0]  %s1, 1088, %s132, [#allocation6], 64, 64, 4
        $region16: #{tpu_custom_call.1} parent=11 // pred_fallthru
          _
        // Predicated region
        $region17: #{tpu_custom_call.1} parent=11 // pred_check
          %p138 = pneg %p84
        $region18: #{tpu_custom_call.1} parent=11 // pred_check_branch
          %140 = sbr.rel (%p138) target = $region20
        $region19: #{tpu_custom_call.1} parent=11 // pred_region
          _
        $region20: #{tpu_custom_call.1} parent=11 // pred_fallthru
          _
      $region12: #{tpu_custom_call.1} parent=5 // pred_fallthru
        _
      %p141 = scmp.lt.s32.totalorder %s16, 2
      // Predicated region
      $region21: #{tpu_custom_call.1} parent=5 // pred_check
        %p142 = pneg %p141
      $region22: #{tpu_custom_call.1} parent=5 // pred_check_branch
        %144 = sbr.rel (%p142) target = $region24
      $region23: #{tpu_custom_call.1} parent=5 // pred_region
        // Predicated region
        $region25: #{tpu_custom_call.1} parent=23 // pred_check
          %p145 = pneg %p36
        $region26: #{tpu_custom_call.1} parent=23 // pred_check_branch
          %147 = sbr.rel (%p145) target = $region28
        $region27: #{tpu_custom_call.1} parent=23 // pred_region
          %s148 = sand.u32 %s26, 1
          %s149 = scalar_lea.sflag [#allocation3], %s148
          %s150 = sand.u32 %s26, 1
          %s151 = smul.addr %s150, 8
          %s152 = scalar_lea.vmem [#allocation2], %s151
          %s154 = ssub.s32 128, 128
          %155 = vsyncadd %s149, %s154
          %s156 = smul.addr %s16, 2
          %s157 = smul.addr %s156, 64
          %s158 = scalar_lea.hbm %s0, %s157
          %s160 = sshll.u32 %s152, 4
          %s161 = int_to_ptr.vmem [resolvable:$true] %s160
          %163 = dma.hbm_to_vmem [thread:$0]  %s158, 128, %s161, %s149
        $region28: #{tpu_custom_call.1} parent=23 // pred_fallthru
          _
      $region24: #{tpu_custom_call.1} parent=5 // pred_fallthru
        _
      %p164 = scmp.le.s32.totalorder 1, %s16
      %p165 = scmp.lt.s32.totalorder %s16, 3
      %p166 = pnand %p164, %p165
      %p167 = pneg %p166
      // Predicated region
      $region29: #{tpu_custom_call.1} parent=5 // pred_check
        _
      $region30: #{tpu_custom_call.1} parent=5 // pred_check_branch
        %169 = sbr.rel (%p166) target = $region32
      $region31: #{tpu_custom_call.1} parent=5 // pred_region
        %s170 = ssub.s32 %s16, 1
        %s171 = sand.u32 %s29, 1
        %s172 = scalar_lea.sflag [#allocation3], %s171
        %s173 = sand.u32 %s29, 1
        %s174 = smul.addr %s173, 8
        %s175 = scalar_lea.vmem [#allocation2], %s174
        // Predicated region
        $region33: #{tpu_custom_call.1} parent=31 // pred_check
          %p176 = pneg %p42
        $region34: #{tpu_custom_call.1} parent=31 // pred_check_branch
          %178 = sbr.rel (%p176) target = $region36
        $region35: #{tpu_custom_call.1} parent=31 // pred_region
          %179 = dma.done %s172, 128
        $region36: #{tpu_custom_call.1} parent=31 // pred_fallthru
          _
        // Predicated region
        $region37: #{tpu_custom_call.1} parent=31 // pred_check
          %p180 = pneg %p63
        $region38: #{tpu_custom_call.1} parent=31 // pred_check_branch
          %182 = sbr.rel (%p180) target = $region40
        $region39: #{tpu_custom_call.1} parent=31 // pred_region
          %183 = dma.done [#allocation6], 1088
        $region40: #{tpu_custom_call.1} parent=31 // pred_fallthru
          _
        %s184 = sand.u32 %s29, 1
        %s185 = scalar_lea.sflag [#allocation3], %s184
        %s186 = sand.u32 %s29, 1
        %s187 = smul.addr %s186, 8
        %s188 = scalar_lea.vmem [#allocation2], %s187
        %p189 = pneg %p42
        %p190 = pneg %p39
        %p191 = pneg %p63
        %p192 = pneg %p60
        %p193 = pneg %p84
        %p194 = pneg %p81
        %p195 = pneg %p110
        %p196 = pneg %p107
        %s197 = sand.u32 %s97, 1
        %s198 = scalar_lea.sflag [#allocation4], %s197
        %s199 = sand.u32 %s97, 1
        %s200 = smul.addr %s199, 8
        %s201 = scalar_lea.vmem [#allocation7], %s200
        %v203 = vld [vmem:[%s175] sm:$0xff]
        %v204 = vld [vmem:[#allocation5] sm:$0xf]
        %v205 = vld [vmem:[#allocation5 + $0x4] sm:$0xf]
        %v206 = vld [vmem:[#allocation5 + $0x8] sm:$0xf]
        %v207 = vld [vmem:[#allocation5 + $0xc] sm:$0xf]
        %v208 = vld [vmem:[#allocation5 + $0x10] sm:$0xf]
        %v209 = vld [vmem:[#allocation5 + $0x14] sm:$0xf]
        %v210 = vld [vmem:[#allocation5 + $0x18] sm:$0xf]
        %v211 = vld [vmem:[#allocation5 + $0x1c] sm:$0xf]
        %v212 = vld [vmem:[#allocation5 + $0x20] sm:$0xf]
        %v213 = vld [vmem:[#allocation5 + $0x24] sm:$0xf]
        %v214 = vld [vmem:[#allocation5 + $0x28] sm:$0xf]
        %v215 = vld [vmem:[#allocation5 + $0x2c] sm:$0xf]
        %v216 = vld [vmem:[#allocation5 + $0x30] sm:$0xf]
        %v217 = vld [vmem:[#allocation5 + $0x34] sm:$0xf]
        %v218 = vld [vmem:[#allocation5 + $0x38] sm:$0xf]
        %v219 = vld [vmem:[#allocation5 + $0x3c] sm:$0xf]
        %v220 = vld [vmem:[#allocation5 + $0x40] sm:$0xf]
        %v221 = vld [vmem:[%s2] sm:$0x1]
        %v223 = vlaneseq
        %v224 = vshrl.u32 %v223, 7
        %v225 = vsub.s32 0, %v224
        %v226 = vrot.slane %v221, %v225
        %v229 = vunpack.c.l.b16 %v203
        %v230 = vunpack.c.h.b16 %v203
        %v231 = vpack.c.b16 %v229, %v229
        %v232 = vpack.c.b16 %v230, %v230
        %v251 = vunpack.c.l.b16 %v204
        %v252 = vunpack.c.l.b16 %v205
        %v253 = vunpack.c.l.b16 %v206
        %v254 = vunpack.c.l.b16 %v207
        %v255 = vunpack.c.l.b16 %v208
        %v256 = vunpack.c.l.b16 %v209
        %v257 = vunpack.c.l.b16 %v210
        %v258 = vunpack.c.l.b16 %v211
        %v259 = vunpack.c.l.b16 %v212
        %v260 = vunpack.c.l.b16 %v213
        %v261 = vunpack.c.l.b16 %v214
        %v262 = vunpack.c.l.b16 %v215
        %v263 = vunpack.c.l.b16 %v216
        %v264 = vunpack.c.l.b16 %v217
        %v265 = vunpack.c.l.b16 %v218
        %v266 = vunpack.c.l.b16 %v219
        %v267 = vunpack.c.l.b16 %v220
        %v268 = vpack.c.b16 %v252, %v251
        %v269 = vpack.c.b16 %v254, %v253
        %v270 = vpack.c.b16 %v256, %v255
        %v271 = vpack.c.b16 %v258, %v257
        %v272 = vpack.c.b16 %v260, %v259
        %v273 = vpack.c.b16 %v262, %v261
        %v274 = vpack.c.b16 %v264, %v263
        %v275 = vpack.c.b16 %v266, %v265
        %v276 = vpack.c.b16 %v267, %v267
        %vm285 = vcmask 56320
        %v287 = vsel %vm285, %v232, 0
        %vm289 = vcmask 1042432
        %vm290 = vcmask 1043456
        %v291 = vsel %vm289, 4294967295, 65535
        %v292 = vsel %vm290, %v291, 0
        %v294 = vand.u32 %v276, %v292
        %296 = vmatprep.subr.bf16.mxu0 0
        %297 = vmatpush1.bf16.msra.mxu0 %v268
        %298 = vmatprep.subr.bf16.mxu0 0
        %299 = vmatpush1.bf16.msra.mxu0 %v269
        %300 = vmatprep.subr.bf16.mxu0 0
        %301 = vmatpush1.bf16.msra.mxu0 %v270
        %302 = vmatprep.subr.bf16.mxu0 0
        %303 = vmatpush1.bf16.msra.mxu0 %v271
        %304 = vmatprep.subr.bf16.mxu0 0
        %305 = vmatpush1.bf16.msra.mxu0 %v272
        %306 = vmatprep.subr.bf16.mxu0 0
        %307 = vmatpush1.bf16.msra.mxu0 %v273
        %308 = vmatprep.subr.bf16.mxu0 0
        %309 = vmatpush1.bf16.msra.mxu0 %v274
        %310 = vmatprep.subr.bf16.mxu0 0
        %311 = vmatpush1.bf16.msra.mxu0 %v275
        %312 = vmatprep.subr.bf16.mxu0 0
        %313 = vmatpush1.bf16.msra.mxu0 %v294
        %314 = vmatprep.subr.bf16.mxu0 0
        %315 = vmatpush1.bf16.msra.mxu0 0
        %316 = vmatprep.subr.bf16.mxu0 0
        %317 = vmatpush1.bf16.msra.mxu0 0
        %318 = vmatprep.subr.bf16.mxu0 0
        %319 = vmatpush1.bf16.msra.mxu0 0
        %320 = vmatprep.subr.bf16.mxu0 0
        %321 = vmatpush1.bf16.msra.mxu0 0
        %322 = vmatprep.subr.bf16.mxu0 0
        %323 = vmatpush1.bf16.msra.mxu0 0
        %324 = vmatprep.subr.bf16.mxu0 0
        %325 = vmatpush1.bf16.msra.mxu0 0
        %326 = vmatprep.subr.bf16.mxu0 0
        %327 = vmatpush1.bf16.msra.mxu0 0
        %328 = vmatprep.mubr.bf16.mxu0 %v287
        %329 = vmatmul.mubr.bf16.gmra.mrb[0].mxu0 %v231
        %v330 = vpop.f32.mrb[0].mxu0
        %v331 = vadd.f32 %v226, %v330
        %v332 = vpop.f32.mrb[0].mxu0
        %v333 = vpop.f32.mrb[0].mxu0
        %v334 = vpop.f32.mrb[0].mxu0
        %335 = vdwg.mxu0
        %vm336 = vcmp.ge.f32.partialorder %v331, 0.0
        %v337 = vmul.f32 %v331, 0.01
        %v338 = vsel %vm336, %v331, %v337
        %339 = vst [vmem:[%s201] sm:$0xff] %v338
        %s340 = sand.u32 %s97, 1
        %s341 = scalar_lea.sflag [#allocation4], %s340
        %s342 = sand.u32 %s97, 1
        %s343 = smul.addr %s342, 8
        %s344 = scalar_lea.vmem [#allocation7], %s343
        // Predicated region
        $region41: #{tpu_custom_call.1} parent=31 // pred_check
          %p345 = pneg %p107
        $region42: #{tpu_custom_call.1} parent=31 // pred_check_branch
          %347 = sbr.rel (%p345) target = $region44
        $region43: #{tpu_custom_call.1} parent=31 // pred_region
          %s349 = ssub.s32 128, 128
          %350 = vsyncadd %s341, %s349
          %s351 = smul.addr %s21, 128
          %s352 = scalar_lea.hbm %s3, %s351
          %s354 = sshll.u32 %s344, 4
          %s355 = int_to_ptr.vmem [resolvable:$true] %s354
          %357 = dma.vmem_to_hbm [thread:$0]  %s355, 128, %s352, %s341
        $region44: #{tpu_custom_call.1} parent=31 // pred_fallthru
          _
      $region32: #{tpu_custom_call.1} parent=5 // pred_fallthru
        _
      %p358 = scmp.le.s32.totalorder 2, %s16
      // Predicated region
      $region45: #{tpu_custom_call.1} parent=5 // pred_check
        %p359 = pneg %p358
      $region46: #{tpu_custom_call.1} parent=5 // pred_check_branch
        %361 = sbr.rel (%p359) target = $region48
      $region47: #{tpu_custom_call.1} parent=5 // pred_region
        %s362 = ssub.s32 %s16, 2
        // Predicated region
        $region49: #{tpu_custom_call.1} parent=47 // pred_check
          %p363 = pneg %p113
        $region50: #{tpu_custom_call.1} parent=47 // pred_check_branch
          %365 = sbr.rel (%p363) target = $region52
        $region51: #{tpu_custom_call.1} parent=47 // pred_region
          %s366 = sand.u32 %s98, 1
          %s367 = scalar_lea.sflag [#allocation4], %s366
          %s368 = sand.u32 %s98, 1
          %s369 = smul.addr %s368, 8
          %s370 = scalar_lea.vmem [#allocation7], %s369
          %371 = dma.done %s367, 128
        $region52: #{tpu_custom_call.1} parent=47 // pred_fallthru
          _
      $region48: #{tpu_custom_call.1} parent=5 // pred_fallthru
        _
    $region6: #{tpu_custom_call.1} parent=1 // loop_footer
      %s20 = sadd.s32 1, %s16
    $region7: #{tpu_custom_call.1} parent=1 // loop_footer_branch
      %15 = sbr.rel target = $region3
    $region8: #{tpu_custom_call.1} parent=1 // loop_exit
      _
    %372 = vsyncpa [#allocation3], 1
    %s373 = scalar_lea.sflag [#allocation3], 1
    %374 = vsyncpa %s373, 1
    %375 = vsyncpa [#allocation6], 1
    %376 = vsyncpa [#allocation4], 1
    %s377 = scalar_lea.sflag [#allocation4], 1
    %378 = vsyncpa %s377, 1

</llo_original>
